<compile_context>
chip_gen: v7x
topology: tpu7x:2x2x1
jax: 0.10.0
libtpu: 0.0.40
codegen_flags: <defaults>
</compile_context>

<pallas_src>
import functools

import jax
import jax.numpy as jnp
from jax.experimental import pallas as pl
from jax.experimental.pallas import tpu as pltpu


# ----------------------------------------------------------------------------
# Kernel
# ----------------------------------------------------------------------------
def _pointnet_kernel(*refs, n_layers, aggregation, n_points, compute_dtype):
    # refs = (x, [wT_l, b_l] * n_layers, wg, bg, out, acc)
    x_ref = refs[0]
    layer_refs = refs[1:1 + 2 * n_layers]
    wg_ref = refs[1 + 2 * n_layers]
    bg_ref = refs[2 + 2 * n_layers]
    o_ref = refs[3 + 2 * n_layers]
    acc_ref = refs[4 + 2 * n_layers]

    n_idx = pl.program_id(1)

    # ---- point MLP on a lane-dense (F, nt) tile ------------------------------
    # K=F(=3) on the first layer wastes most of an MXU pass but its slot is
    # otherwise idle; layer >=2 runs with a 128-multiple lane-dense free dim.
    h = x_ref[...]                                           # (F, nt)
    for l in range(n_layers):
        w = layer_refs[2 * l][...]                           # (d_out, d_in)
        b = layer_refs[2 * l + 1][...]                       # (d_out, 1) f32
        h = jnp.dot(w, h, preferred_element_type=jnp.float32)
        h = jnp.maximum(h + b, 0.0)                          # (d_out, nt) f32
        if l + 1 < n_layers:
            h = h.astype(compute_dtype)                      # bf16 MXU operand

    # ---- partial reduction over this point tile (cross-lane, XLU) ------------
    if aggregation == 'max':
        tile_red = jnp.max(h, axis=1, keepdims=True)         # (h_last, 1)
    else:  # 'mean' and 'sum' accumulate a running sum
        tile_red = jnp.sum(h, axis=1, keepdims=True)

    # Initialise once, combine unconditionally (keeps the combine in the main
    # basic block so it overlaps with the next tile's DMA/matmul).
    @pl.when(n_idx == 0)
    def _():
        init = -jnp.inf if aggregation == 'max' else 0.0
        acc_ref[...] = jnp.full(acc_ref.shape, init, dtype=acc_ref.dtype)

    if aggregation == 'max':
        acc_ref[...] = jnp.maximum(acc_ref[...], tile_red)
    else:
        acc_ref[...] = acc_ref[...] + tile_red

    # ---- global MLP on the fully-reduced features (last point tile only) -----
    @pl.when(n_idx == pl.num_programs(1) - 1)
    def _():
        g = acc_ref[...]                                     # (h_last, 1) f32
        if aggregation == 'mean':
            g = g * jnp.float32(1.0 / n_points)
        # (1, h_last) @ (h_last, out_dim), expressed as a contraction over
        # dim 0 of both operands (avoids an explicit transpose of g).
        out = jax.lax.dot_general(
            g, wg_ref[...],
            dimension_numbers=(((0,), (0,)), ((), ())),
            preferred_element_type=jnp.float32)              # (1, out_dim)
        out = jnp.maximum(out + bg_ref[...], 0.0)
        o_ref[...] = out.astype(o_ref.dtype)


# ----------------------------------------------------------------------------
# Wrapper
# ----------------------------------------------------------------------------
def _vmem_limit_bytes():
    # ~75% of physical VMEM: 96 MiB on v5e/v6e (128 MiB), 48 MiB on v7x (64 MiB).
    try:
        cap = int(pltpu.get_tpu_info().vmem_capacity_bytes)
    except Exception:
        cap = 64 << 20
    return int(min(cap * 3 // 4, 96 << 20))


def _default_point_tile(N):
    # Large lane-dense tiles amortise the ~0.35 us per-grid-step overhead and
    # give long contiguous DMA bursts; 4K points easily fits VMEM on all gens
    # once the (B, F, N) layout removes the 3->128 lane padding.
    cap = 4096
    if N <= cap or N % 128 != 0:
        return N
    nt = cap
    while nt >= 128:
        if N % nt == 0:
            return nt
        nt -= 128
    return N


def pointnet_forward(point_cloud, params, aggregation='max', *,
                     nt=None, compute_dtype=jnp.bfloat16):
    if aggregation not in ('max', 'mean', 'sum'):
        raise ValueError(
            "Invalid aggregation method. Choose from 'max', 'mean', or 'sum'.")

    B, N, F = point_cloud.shape
    point_layers = params['point_layers']          # list of (w (in,out), b (out,))
    wg, bg = params['wg'], params['bg']            # (h_last, out_dim), (out_dim,)
    n_layers = len(point_layers)
    h_last = point_layers[-1][0].shape[1]
    out_dim = wg.shape[1]

    nt = _default_point_tile(N) if nt is None else nt
    assert N % nt == 0, "N must be divisible by the point tile"
    assert nt == N or nt % 128 == 0, \
        "point tile must be a multiple of 128 lanes (or all of N)"
    grid = (B, N // nt)   # batch axis has B >= 2 steps -> shards over v7x cores

    # One-time XLA transpose: points into lanes, features on sublanes.
    x_t = jnp.swapaxes(point_cloud, 1, 2).astype(compute_dtype)      # (B, F, N)

    # Kernel-layout weights: transposed point-MLP weights in compute dtype,
    # column biases and the (tiny, run-once) global MLP in f32.
    weight_args = []
    for (w, b) in point_layers:
        weight_args.append(jnp.asarray(w).T.astype(compute_dtype))             # (out, in)
        weight_args.append(jnp.asarray(b).reshape(-1, 1).astype(jnp.float32))  # (out, 1)
    weight_args.append(jnp.asarray(wg).astype(jnp.float32))                    # (h_last, out)
    weight_args.append(jnp.asarray(bg).reshape(1, -1).astype(jnp.float32))     # (1, out)

    in_specs = [pl.BlockSpec((None, F, nt), lambda b, n: (b, 0, n))]
    for w in weight_args:                          # tiny -> VMEM resident
        in_specs.append(pl.BlockSpec(w.shape, lambda b, n: (0, 0)))

    kernel = functools.partial(_pointnet_kernel,
                               n_layers=n_layers,
                               aggregation=aggregation,
                               n_points=N,
                               compute_dtype=compute_dtype)

    dims = [F] + [w.shape[1] for (w, _) in point_layers]
    flops = 2 * B * N * sum(di * do for di, do in zip(dims[:-1], dims[1:]))
    flops += 2 * B * h_last * out_dim
    bytes_accessed = (point_cloud.size * jnp.dtype(compute_dtype).itemsize
                      + sum(int(w.size) * w.dtype.itemsize for w in weight_args)
                      + B * out_dim * 4)

    out = pl.pallas_call(
        kernel,
        out_shape=jax.ShapeDtypeStruct((B, 1, out_dim), jnp.float32),
        grid=grid,
        in_specs=in_specs,
        out_specs=pl.BlockSpec((None, 1, out_dim), lambda b, n: (b, 0, 0)),
        scratch_shapes=[pltpu.VMEM((h_last, 1), jnp.float32)],
        compiler_params=pltpu.CompilerParams(
            dimension_semantics=("parallel", "arbitrary"),
            vmem_limit_bytes=_vmem_limit_bytes()),
        cost_estimate=pl.CostEstimate(flops=int(flops), transcendentals=0,
                                      bytes_accessed=int(bytes_accessed)),
    )(x_t, *weight_args)

    return out.reshape(B, out_dim)


# ----------------------------------------------------------------------------
# Pure-JAX reference (same math as the PyTorch module) for validation
# ----------------------------------------------------------------------------
def pointnet_reference(point_cloud, params, aggregation='max'):
    h = point_cloud
    for (w, b) in params['point_layers']:
        h = jax.nn.relu(h @ w + b)
    if aggregation == 'max':
        g = jnp.max(h, axis=1)
    elif aggregation == 'mean':
        g = jnp.mean(h, axis=1)
    elif aggregation == 'sum':
        g = jnp.sum(h, axis=1)
    else:
        raise ValueError(aggregation)
    return jax.nn.relu(g @ params['wg'] + params['bg'])


# ----------------------------------------------------------------------------
# Deterministic parameter init (nn.Linear equivalent, stored as (in, out))
# ----------------------------------------------------------------------------
def init_params(key, input_dim, hidden_dims, output_dim):
    layers = []
    prev = input_dim
    keys = jax.random.split(key, len(hidden_dims) + 1)
    for dim, kk in zip(hidden_dims, keys[:-1]):
        kw, kb = jax.random.split(kk)
        w = (0.2 * jax.random.normal(kw, (prev, dim))).astype(jnp.float32)
        b = (0.1 * jax.random.normal(kb, (dim,))).astype(jnp.float32)
        layers.append((w, b))
        prev = dim
    kw, kb = jax.random.split(keys[-1])
    wg = (0.2 * jax.random.normal(kw, (prev, output_dim))).astype(jnp.float32)
    bg = (0.1 * jax.random.normal(kb, (output_dim,))).astype(jnp.float32)
    return {'point_layers': layers, 'wg': wg, 'bg': bg}


if __name__ == "__main__":
    # Small shapes consistent with the module: 3-D points, 2 hidden layers.
    B, N, F = 2, 256, 3
    hidden_dims = [32, 32]
    output_dim = 16

    root = jax.random.PRNGKey(0)
    k_pts, k_par = jax.random.split(root)
    point_cloud = jax.random.normal(k_pts, (B, N, F), dtype=jnp.float32)
    params = init_params(k_par, F, hidden_dims, output_dim)

    # nt=128 -> grid (2, 2): exercises the parallel batch axis and the
    # point-tile accumulator with legal lane-dense (F, 128) blocks.

    # f32 compute path: validates the kernel math (tolerance allows for MXU vs
    # XLA default matmul-precision differences on f32 operands).
    for agg in ('max', 'mean'):
        out = jax.block_until_ready(
            pointnet_forward(point_cloud, params, agg, nt=128,
                             compute_dtype=jnp.float32))
        ref = jax.block_until_ready(pointnet_reference(point_cloud, params, agg))
        assert out.shape == (B, output_dim)
        err = float(jnp.max(jnp.abs(out - ref)))
        assert jnp.allclose(out, ref, atol=1e-2, rtol=1e-2), \
            f"{agg} f32 path max abs err {err}"

    # bf16 compute path (production default): halves the dominant HBM stream.
    out_bf16 = jax.block_until_ready(
        pointnet_forward(point_cloud, params, 'max', nt=128,
                         compute_dtype=jnp.bfloat16))
    ref = jax.block_until_ready(pointnet_reference(point_cloud, params, 'max'))
    err = float(jnp.max(jnp.abs(out_bf16 - ref)))
    assert jnp.allclose(out_bf16, ref, atol=5e-2, rtol=5e-2), \
        f"bf16 path max abs err {err}"

    print("KERNEL_OK")
</pallas_src>

<mosaic_0001>
module attributes {stable_mosaic.version = 11 : i64} {
  func.func @_pointnet_kernel(%arg0: i32, %arg1: i32, %arg2: memref<1x3x128xf32, #tpu.memory_space<vmem>>, %arg3: memref<32x3xf32, #tpu.memory_space<vmem>>, %arg4: memref<32x1xf32, #tpu.memory_space<vmem>>, %arg5: memref<32x32xf32, #tpu.memory_space<vmem>>, %arg6: memref<32x1xf32, #tpu.memory_space<vmem>>, %arg7: memref<32x16xf32, #tpu.memory_space<vmem>>, %arg8: memref<1x16xf32, #tpu.memory_space<vmem>>, %arg9: memref<1x1x16xf32, #tpu.memory_space<vmem>>, %arg10: memref<32x1xf32, #tpu.memory_space<vmem>>) attributes {dimension_semantics = [#tpu.dimension_semantics<parallel>, #tpu.dimension_semantics<arbitrary>], iteration_bounds = array<i64: 2, 2>, scalar_prefetch = 0 : i64, scratch_operands = 1 : i64, tpu.core_type = #tpu.core_type<tc>, window_params = [{transform_indices = @transform_0, window_bounds = array<i64: 1, 3, 128>}, {pipeline_mode = #tpu.pipeline_mode<synchronous>, transform_indices = @transform_1, window_bounds = array<i64: 32, 3>}, {pipeline_mode = #tpu.pipeline_mode<synchronous>, transform_indices = @transform_2, window_bounds = array<i64: 32, 1>}, {pipeline_mode = #tpu.pipeline_mode<synchronous>, transform_indices = @transform_3, window_bounds = array<i64: 32, 32>}, {pipeline_mode = #tpu.pipeline_mode<synchronous>, transform_indices = @transform_4, window_bounds = array<i64: 32, 1>}, {pipeline_mode = #tpu.pipeline_mode<synchronous>, transform_indices = @transform_5, window_bounds = array<i64: 32, 16>}, {pipeline_mode = #tpu.pipeline_mode<synchronous>, transform_indices = @transform_6, window_bounds = array<i64: 1, 16>}, {transform_indices = @transform_7, window_bounds = array<i64: 1, 1, 16>}]} {
    %c0 = arith.constant 0 : index
    %c0_0 = arith.constant 0 : index
    %c0_1 = arith.constant 0 : index
    %0 = vector.load %arg2[%c0, %c0_0, %c0_1] : memref<1x3x128xf32, #tpu.memory_space<vmem>>, vector<1x3x128xf32>
    %1 = vector.shape_cast %0 : vector<1x3x128xf32> to vector<3x128xf32>
    %c0_2 = arith.constant 0 : index
    %c0_3 = arith.constant 0 : index
    %2 = vector.load %arg3[%c0_2, %c0_3] : memref<32x3xf32, #tpu.memory_space<vmem>>, vector<32x3xf32>
    %c0_4 = arith.constant 0 : index
    %c0_5 = arith.constant 0 : index
    %3 = vector.load %arg4[%c0_4, %c0_5] : memref<32x1xf32, #tpu.memory_space<vmem>>, vector<32x1xf32>
    %cst = arith.constant dense<0.000000e+00> : vector<32x128xf32>
    %4 = tpu.matmul %2, %1, %cst {dimension_numbers = #tpu.dot_dimension_numbers<[1], [0], [0], [1], [0, 0, 1, 1], [], []>} : vector<32x3xf32>, vector<3x128xf32>, vector<32x128xf32> -> vector<32x128xf32>
    %5 = vector.broadcast %3 : vector<32x1xf32> to vector<32x128xf32>
    %6 = arith.addf %4, %5 : vector<32x128xf32>
    %cst_6 = arith.constant 0.000000e+00 : f32
    %7 = vector.broadcast %cst_6 : f32 to vector<32x128xf32>
    %8 = arith.maximumf %6, %7 : vector<32x128xf32>
    %c0_7 = arith.constant 0 : index
    %c0_8 = arith.constant 0 : index
    %9 = vector.load %arg5[%c0_7, %c0_8] : memref<32x32xf32, #tpu.memory_space<vmem>>, vector<32x32xf32>
    %c0_9 = arith.constant 0 : index
    %c0_10 = arith.constant 0 : index
    %10 = vector.load %arg6[%c0_9, %c0_10] : memref<32x1xf32, #tpu.memory_space<vmem>>, vector<32x1xf32>
    %cst_11 = arith.constant dense<0.000000e+00> : vector<32x128xf32>
    %11 = tpu.matmul %9, %8, %cst_11 {dimension_numbers = #tpu.dot_dimension_numbers<[1], [0], [0], [1], [0, 0, 1, 1], [], []>} : vector<32x32xf32>, vector<32x128xf32>, vector<32x128xf32> -> vector<32x128xf32>
    %12 = vector.broadcast %10 : vector<32x1xf32> to vector<32x128xf32>
    %13 = arith.addf %11, %12 : vector<32x128xf32>
    %cst_12 = arith.constant 0.000000e+00 : f32
    %14 = vector.broadcast %cst_12 : f32 to vector<32x128xf32>
    %15 = arith.maximumf %13, %14 : vector<32x128xf32>
    %cst_13 = arith.constant dense<0xFF800000> : vector<32xf32>
    %16 = vector.multi_reduction <maximumf>, %15, %cst_13 [1] : vector<32x128xf32> to vector<32xf32>
    %17 = vector.shape_cast %16 : vector<32xf32> to vector<32x1xf32>
    %c0_i32 = arith.constant 0 : i32
    %18 = arith.cmpi eq, %arg1, %c0_i32 : i32
    %19 = arith.extui %18 : i1 to i32
    %c0_i32_14 = arith.constant 0 : i32
    %20 = arith.cmpi ne, %19, %c0_i32_14 : i32
    scf.if %20 {
      %cst_20 = arith.constant 0xFF800000 : f32
      %27 = vector.broadcast %cst_20 : f32 to vector<32x1xf32>
      %c0_21 = arith.constant 0 : index
      %c0_22 = arith.constant 0 : index
      %28 = vector.load %arg10[%c0_21, %c0_22] : memref<32x1xf32, #tpu.memory_space<vmem>>, vector<32x1xf32>
      tpu.vector_store %arg10[%c0_21, %c0_22], %27 {strides = array<i32>} : memref<32x1xf32, #tpu.memory_space<vmem>>, vector<32x1xf32>,
    } else {
    }
    %c0_15 = arith.constant 0 : index
    %c0_16 = arith.constant 0 : index
    %21 = vector.load %arg10[%c0_15, %c0_16] : memref<32x1xf32, #tpu.memory_space<vmem>>, vector<32x1xf32>
    %22 = arith.maximumf %21, %17 : vector<32x1xf32>
    %c0_17 = arith.constant 0 : index
    %c0_18 = arith.constant 0 : index
    %23 = vector.load %arg10[%c0_17, %c0_18] : memref<32x1xf32, #tpu.memory_space<vmem>>, vector<32x1xf32>
    tpu.vector_store %arg10[%c0_17, %c0_18], %22 {strides = array<i32>} : memref<32x1xf32, #tpu.memory_space<vmem>>, vector<32x1xf32>,
    %c1_i32 = arith.constant 1 : i32
    %24 = arith.cmpi eq, %arg1, %c1_i32 : i32
    %25 = arith.extui %24 : i1 to i32
    %c0_i32_19 = arith.constant 0 : i32
    %26 = arith.cmpi ne, %25, %c0_i32_19 : i32
    scf.if %26 {
      %c0_20 = arith.constant 0 : index
      %c0_21 = arith.constant 0 : index
      %27 = vector.load %arg10[%c0_20, %c0_21] : memref<32x1xf32, #tpu.memory_space<vmem>>, vector<32x1xf32>
      %c0_22 = arith.constant 0 : index
      %c0_23 = arith.constant 0 : index
      %28 = vector.load %arg7[%c0_22, %c0_23] : memref<32x16xf32, #tpu.memory_space<vmem>>, vector<32x16xf32>
      %cst_24 = arith.constant dense<0.000000e+00> : vector<1x16xf32>
      %29 = tpu.matmul %27, %28, %cst_24 {dimension_numbers = #tpu.dot_dimension_numbers<[0], [0], [1], [1], [0, 1, 1, 1], [], []>} : vector<32x1xf32>, vector<32x16xf32>, vector<1x16xf32> -> vector<1x16xf32>
      %c0_25 = arith.constant 0 : index
      %c0_26 = arith.constant 0 : index
      %30 = vector.load %arg8[%c0_25, %c0_26] : memref<1x16xf32, #tpu.memory_space<vmem>>, vector<1x16xf32>
      %31 = arith.addf %29, %30 : vector<1x16xf32>
      %cst_27 = arith.constant 0.000000e+00 : f32
      %32 = vector.broadcast %cst_27 : f32 to vector<1x16xf32>
      %33 = arith.maximumf %31, %32 : vector<1x16xf32>
      %c0_28 = arith.constant 0 : index
      %c0_29 = arith.constant 0 : index
      %c0_30 = arith.constant 0 : index
      %34 = vector.load %arg9[%c0_28, %c0_29, %c0_30] : memref<1x1x16xf32, #tpu.memory_space<vmem>>, vector<1x1x16xf32>
      %35 = vector.shape_cast %34 : vector<1x1x16xf32> to vector<1x16xf32>
      %36 = vector.shape_cast %33 : vector<1x16xf32> to vector<1x1x16xf32>
      tpu.vector_store %arg9[%c0_28, %c0_29, %c0_30], %36 {strides = array<i32>} : memref<1x1x16xf32, #tpu.memory_space<vmem>>, vector<1x1x16xf32>,
    } else {
    }
    return
  }
  func.func @transform_0(%arg0: i32, %arg1: i32) -> (i32, i32, i32) {
    %c0_i32 = arith.constant 0 : i32
    %c0_i32_0 = arith.constant 0 : i32
    return %arg0, %c0_i32, %arg1 : i32, i32, i32
  }
  func.func @transform_1(%arg0: i32, %arg1: i32) -> (i32, i32) {
    %c0_i32 = arith.constant 0 : i32
    %c0_i32_0 = arith.constant 0 : i32
    %c0_i32_1 = arith.constant 0 : i32
    return %c0_i32, %c0_i32_0 : i32, i32
  }
  func.func @transform_2(%arg0: i32, %arg1: i32) -> (i32, i32) {
    %c0_i32 = arith.constant 0 : i32
    %c0_i32_0 = arith.constant 0 : i32
    %c0_i32_1 = arith.constant 0 : i32
    return %c0_i32, %c0_i32_0 : i32, i32
  }
  func.func @transform_3(%arg0: i32, %arg1: i32) -> (i32, i32) {
    %c0_i32 = arith.constant 0 : i32
    %c0_i32_0 = arith.constant 0 : i32
    %c0_i32_1 = arith.constant 0 : i32
    return %c0_i32, %c0_i32_0 : i32, i32
  }
  func.func @transform_4(%arg0: i32, %arg1: i32) -> (i32, i32) {
    %c0_i32 = arith.constant 0 : i32
    %c0_i32_0 = arith.constant 0 : i32
    %c0_i32_1 = arith.constant 0 : i32
    return %c0_i32, %c0_i32_0 : i32, i32
  }
  func.func @transform_5(%arg0: i32, %arg1: i32) -> (i32, i32) {
    %c0_i32 = arith.constant 0 : i32
    %c0_i32_0 = arith.constant 0 : i32
    %c0_i32_1 = arith.constant 0 : i32
    return %c0_i32, %c0_i32_0 : i32, i32
  }
  func.func @transform_6(%arg0: i32, %arg1: i32) -> (i32, i32) {
    %c0_i32 = arith.constant 0 : i32
    %c0_i32_0 = arith.constant 0 : i32
    %c0_i32_1 = arith.constant 0 : i32
    return %c0_i32, %c0_i32_0 : i32, i32
  }
  func.func @transform_7(%arg0: i32, %arg1: i32) -> (i32, i32, i32) {
    %c0_i32 = arith.constant 0 : i32
    %c0_i32_0 = arith.constant 0 : i32
    %c0_i32_1 = arith.constant 0 : i32
    return %arg0, %c0_i32, %c0_i32_0 : i32, i32, i32
  }
}

</mosaic_0001>

<llo_original>
// kernel: tpu_custom_call.1
$region0: #{tpu_custom_call.1}
  #allocation0 [shape = 'u32[]', space=smem, size = 0x4, offset = 0x4, fixed_abs, tag = 'smem constant byte address 0x4 - core index']
  #allocation1 [shape = 'u32[144,128]{1,0:T(1,128)}', space=vmem, size = 0x12000, scoped, tag = 'internal scratch']
  #allocation2 [shape = 'f32[32,1]{1,0:T(8,128)}', space=vmem, size = 0x4000, scoped, tag = 'scratch operand']
  %s0 = inlined_call_operand.vmem [shape: f32[2,3,256], index: 0, kind: input, shape index: {}]
  %s1 = inlined_call_operand.vmem [shape: f32[32,3], index: 1, kind: input, shape index: {}]
  %s2 = inlined_call_operand.vmem [shape: f32[32,1], index: 2, kind: input, shape index: {}]
  %s3 = inlined_call_operand.vmem [shape: f32[32,32], index: 3, kind: input, shape index: {}]
  %s4 = inlined_call_operand.vmem [shape: f32[32,1], index: 4, kind: input, shape index: {}]
  %s5 = inlined_call_operand.vmem [shape: f32[32,16], index: 5, kind: input, shape index: {}]
  %s6 = inlined_call_operand.vmem [shape: f32[1,16], index: 6, kind: input, shape index: {}]
  %s7 = inlined_call_operand.hbm [shape: f32[2,1,16], index: 7, kind: output, shape index: {}]
  %s8 = sld [smem:[#allocation0]]
  $region69: #{tpu_custom_call.1} parent=0
    _
  %s10 = ssub.s32 1, %s8
  %s11 = scalar_select 0, %s10, %s8
  $region1: #{tpu_custom_call.1} parent=0
    #allocation3 [shape = 'u8[1024]{0}', space=vmem, size = 0x400, scoped, tag = 'output window, operand 0']
    #allocation4 [shape = 's32[2]{0}', space=sflag, size = 0x8, scoped, tag = 'scoped memory for tpu_custom_call.1']
    %12 = vsyncpa [#allocation4], 0
    %s13 = scalar_lea.sflag [#allocation4], 1
    %14 = vsyncpa %s13, 0
    loop: start=0, step=1, limit=6
    $region2: #{tpu_custom_call.1} parent=1 // loop_pre_header
      _
    $region3: #{tpu_custom_call.1} parent=1 // loop_header
      %s16 = sphi 0, %s20
      %p17 = scmp.ge.s32.totalorder %s16, 6
      %s23 = sphi 0, %s35
      %s24 = sphi 0, %s31
      %s25 = sphi 0, %s23
      %s26 = sphi 0, %s24
      %s27 = sphi 0, %s25
      %s28 = sphi 0, %s26
      %s40 = sphi 0, %s42
      %s43 = sphi 0, %s40
      %s44 = sphi 0, %s43
      %s60 = sphi 0, %s44
      %s64 = sphi 0, %s64
      %s66 = sphi 0, %s64
      %s67 = sphi 0, %s66
      %s81 = sphi 0, %s67
      %s85 = sphi 0, %s85
      %s87 = sphi 0, %s85
      %s88 = sphi 0, %s87
      %s102 = sphi 0, %s88
      %s106 = sphi 0, %s106
      %s108 = sphi 0, %s106
      %s109 = sphi 0, %s108
      %s123 = sphi 0, %s109
      %s127 = sphi 0, %s127
      %s129 = sphi 0, %s127
      %s130 = sphi 0, %s129
      %s144 = sphi 0, %s130
      %s148 = sphi 0, %s148
      %s150 = sphi 0, %s148
      %s151 = sphi 0, %s150
      %s165 = sphi 0, %s151
      %s169 = sphi 0, %s169
      %s171 = sphi 0, %s169
      %s172 = sphi 0, %s171
      %s186 = sphi 0, %s172
      %s192 = sphi 0, %s194
      %s195 = sphi 0, %s192
      %s196 = sphi 0, %s195
      %s212 = sphi 0, %s196
    $region4: #{tpu_custom_call.1} parent=1 // loop_header_branch
      %19 = sbr.rel (%p17) target = $region8
    $region5: #{tpu_custom_call.1} parent=1 // loop_body
      %s21 = ssub.s32 %s16, 1
      %s22 = ssub.s32 %s16, 2
      %s29 = sadd.s32 1, %s24
      %p30 = scmp.ge.s32.totalorder %s29, 2
      %s31 = scalar_select %p30, 0, %s29
      %s32 = sadd.s32 1, %s23
      %s33 = scalar_select %p30, %s32, %s23
      %p34 = scmp.ge.s32.totalorder %s33, 2
      %s35 = scalar_select %p34, 0, %s33
      %s36 = ssub.s32 %s23, %s35
      %s37 = ssub.s32 %s24, %s31
      %s38 = sor.u32 %s36, %s37
      %p39 = scmp.eq.s32.totalorder %s38, 0
      %s41 = sadd.s32 %s40, 1
      %s42 = scalar_select %p39, %s40, %s41
      %p45 = pneg %p39
      %p46 = scmp.eq.s32.totalorder %s16, 3
      %p47 = por %p45, %p46
      %p48 = scmp.ne.s32.totalorder %s40, %s43
      %p49 = scmp.eq.s32.totalorder %s16, 0
      %p50 = por %p48, %p49
      %p51 = scmp.ne.s32.totalorder %s40, %s43
      %p52 = scmp.eq.s32.totalorder %s21, 3
      %p53 = por %p51, %p52
      %p54 = scmp.ne.s32.totalorder %s43, %s44
      %p55 = scmp.eq.s32.totalorder %s21, 0
      %p56 = por %p54, %p55
      %p57 = scmp.ne.s32.totalorder %s43, %s44
      %p58 = scmp.eq.s32.totalorder %s22, 3
      %p59 = por %p57, %p58
      %p61 = scmp.ne.s32.totalorder %s44, %s60
      %p62 = scmp.eq.s32.totalorder %s22, 0
      %p63 = por %p61, %p62
      %s65 = sadd.s32 %s64, 1
      %p68 = scmp.eq.s32.totalorder %s16, 3
      %p69 = scmp.ne.s32.totalorder %s64, %s66
      %p70 = scmp.eq.s32.totalorder %s16, 0
      %p71 = por %p69, %p70
      %p72 = scmp.ne.s32.totalorder %s64, %s66
      %p73 = scmp.eq.s32.totalorder %s21, 3
      %p74 = por %p72, %p73
      %p75 = scmp.ne.s32.totalorder %s66, %s67
      %p76 = scmp.eq.s32.totalorder %s21, 0
      %p77 = por %p75, %p76
      %p78 = scmp.ne.s32.totalorder %s66, %s67
      %p79 = scmp.eq.s32.totalorder %s22, 3
      %p80 = por %p78, %p79
      %p82 = scmp.ne.s32.totalorder %s67, %s81
      %p83 = scmp.eq.s32.totalorder %s22, 0
      %p84 = por %p82, %p83
      %s86 = sadd.s32 %s85, 1
      %p89 = scmp.eq.s32.totalorder %s16, 3
      %p90 = scmp.ne.s32.totalorder %s85, %s87
      %p91 = scmp.eq.s32.totalorder %s16, 0
      %p92 = por %p90, %p91
      %p93 = scmp.ne.s32.totalorder %s85, %s87
      %p94 = scmp.eq.s32.totalorder %s21, 3
      %p95 = por %p93, %p94
      %p96 = scmp.ne.s32.totalorder %s87, %s88
      %p97 = scmp.eq.s32.totalorder %s21, 0
      %p98 = por %p96, %p97
      %p99 = scmp.ne.s32.totalorder %s87, %s88
      %p100 = scmp.eq.s32.totalorder %s22, 3
      %p101 = por %p99, %p100
      %p103 = scmp.ne.s32.totalorder %s88, %s102
      %p104 = scmp.eq.s32.totalorder %s22, 0
      %p105 = por %p103, %p104
      %s107 = sadd.s32 %s106, 1
      %p110 = scmp.eq.s32.totalorder %s16, 3
      %p111 = scmp.ne.s32.totalorder %s106, %s108
      %p112 = scmp.eq.s32.totalorder %s16, 0
      %p113 = por %p111, %p112
      %p114 = scmp.ne.s32.totalorder %s106, %s108
      %p115 = scmp.eq.s32.totalorder %s21, 3
      %p116 = por %p114, %p115
      %p117 = scmp.ne.s32.totalorder %s108, %s109
      %p118 = scmp.eq.s32.totalorder %s21, 0
      %p119 = por %p117, %p118
      %p120 = scmp.ne.s32.totalorder %s108, %s109
      %p121 = scmp.eq.s32.totalorder %s22, 3
      %p122 = por %p120, %p121
      %p124 = scmp.ne.s32.totalorder %s109, %s123
      %p125 = scmp.eq.s32.totalorder %s22, 0
      %p126 = por %p124, %p125
      %s128 = sadd.s32 %s127, 1
      %p131 = scmp.eq.s32.totalorder %s16, 3
      %p132 = scmp.ne.s32.totalorder %s127, %s129
      %p133 = scmp.eq.s32.totalorder %s16, 0
      %p134 = por %p132, %p133
      %p135 = scmp.ne.s32.totalorder %s127, %s129
      %p136 = scmp.eq.s32.totalorder %s21, 3
      %p137 = por %p135, %p136
      %p138 = scmp.ne.s32.totalorder %s129, %s130
      %p139 = scmp.eq.s32.totalorder %s21, 0
      %p140 = por %p138, %p139
      %p141 = scmp.ne.s32.totalorder %s129, %s130
      %p142 = scmp.eq.s32.totalorder %s22, 3
      %p143 = por %p141, %p142
      %p145 = scmp.ne.s32.totalorder %s130, %s144
      %p146 = scmp.eq.s32.totalorder %s22, 0
      %p147 = por %p145, %p146
      %s149 = sadd.s32 %s148, 1
      %p152 = scmp.eq.s32.totalorder %s16, 3
      %p153 = scmp.ne.s32.totalorder %s148, %s150
      %p154 = scmp.eq.s32.totalorder %s16, 0
      %p155 = por %p153, %p154
      %p156 = scmp.ne.s32.totalorder %s148, %s150
      %p157 = scmp.eq.s32.totalorder %s21, 3
      %p158 = por %p156, %p157
      %p159 = scmp.ne.s32.totalorder %s150, %s151
      %p160 = scmp.eq.s32.totalorder %s21, 0
      %p161 = por %p159, %p160
      %p162 = scmp.ne.s32.totalorder %s150, %s151
      %p163 = scmp.eq.s32.totalorder %s22, 3
      %p164 = por %p162, %p163
      %p166 = scmp.ne.s32.totalorder %s151, %s165
      %p167 = scmp.eq.s32.totalorder %s22, 0
      %p168 = por %p166, %p167
      %s170 = sadd.s32 %s169, 1
      %p173 = scmp.eq.s32.totalorder %s16, 3
      %p174 = scmp.ne.s32.totalorder %s169, %s171
      %p175 = scmp.eq.s32.totalorder %s16, 0
      %p176 = por %p174, %p175
      %p177 = scmp.ne.s32.totalorder %s169, %s171
      %p178 = scmp.eq.s32.totalorder %s21, 3
      %p179 = por %p177, %p178
      %p180 = scmp.ne.s32.totalorder %s171, %s172
      %p181 = scmp.eq.s32.totalorder %s21, 0
      %p182 = por %p180, %p181
      %p183 = scmp.ne.s32.totalorder %s171, %s172
      %p184 = scmp.eq.s32.totalorder %s22, 3
      %p185 = por %p183, %p184
      %p187 = scmp.ne.s32.totalorder %s172, %s186
      %p188 = scmp.eq.s32.totalorder %s22, 0
      %p189 = por %p187, %p188
      %s190 = ssub.s32 %s23, %s35
      %p191 = scmp.eq.s32.totalorder %s190, 0
      %s193 = sadd.s32 %s192, 1
      %s194 = scalar_select %p191, %s192, %s193
      %p197 = pneg %p191
      %p198 = scmp.eq.s32.totalorder %s16, 3
      %p199 = por %p197, %p198
      %p200 = scmp.ne.s32.totalorder %s192, %s195
      %p201 = scmp.eq.s32.totalorder %s16, 0
      %p202 = por %p200, %p201
      %p203 = scmp.ne.s32.totalorder %s192, %s195
      %p204 = scmp.eq.s32.totalorder %s21, 3
      %p205 = por %p203, %p204
      %p206 = scmp.ne.s32.totalorder %s195, %s196
      %p207 = scmp.eq.s32.totalorder %s21, 0
      %p208 = por %p206, %p207
      %p209 = scmp.ne.s32.totalorder %s195, %s196
      %p210 = scmp.eq.s32.totalorder %s22, 3
      %p211 = por %p209, %p210
      %p213 = scmp.ne.s32.totalorder %s196, %s212
      %p214 = scmp.eq.s32.totalorder %s22, 0
      %p215 = por %p213, %p214
      %p216 = scmp.le.s32.totalorder 1, %s16
      %p217 = scmp.lt.s32.totalorder %s16, 5
      %p218 = pnand %p216, %p217
      %p219 = pneg %p218
      // Predicated region
      $region9: #{tpu_custom_call.1} parent=5 // pred_check
        _
      $region10: #{tpu_custom_call.1} parent=5 // pred_check_branch
        %221 = sbr.rel (%p218) target = $region12
      $region11: #{tpu_custom_call.1} parent=5 // pred_region
        %s222 = ssub.s32 %s16, 1
        // Predicated region
        $region13: #{tpu_custom_call.1} parent=11 // pred_check
          %p223 = pneg %p77
        $region14: #{tpu_custom_call.1} parent=11 // pred_check_branch
          %225 = sbr.rel (%p223) target = $region16
        $region15: #{tpu_custom_call.1} parent=11 // pred_region
          _
        $region16: #{tpu_custom_call.1} parent=11 // pred_fallthru
          _
        // Predicated region
        $region17: #{tpu_custom_call.1} parent=11 // pred_check
          %p226 = pneg %p98
        $region18: #{tpu_custom_call.1} parent=11 // pred_check_branch
          %228 = sbr.rel (%p226) target = $region20
        $region19: #{tpu_custom_call.1} parent=11 // pred_region
          _
        $region20: #{tpu_custom_call.1} parent=11 // pred_fallthru
          _
        // Predicated region
        $region21: #{tpu_custom_call.1} parent=11 // pred_check
          %p229 = pneg %p119
        $region22: #{tpu_custom_call.1} parent=11 // pred_check_branch
          %231 = sbr.rel (%p229) target = $region24
        $region23: #{tpu_custom_call.1} parent=11 // pred_region
          _
        $region24: #{tpu_custom_call.1} parent=11 // pred_fallthru
          _
        // Predicated region
        $region25: #{tpu_custom_call.1} parent=11 // pred_check
          %p232 = pneg %p140
        $region26: #{tpu_custom_call.1} parent=11 // pred_check_branch
          %234 = sbr.rel (%p232) target = $region28
        $region27: #{tpu_custom_call.1} parent=11 // pred_region
          _
        $region28: #{tpu_custom_call.1} parent=11 // pred_fallthru
          _
        // Predicated region
        $region29: #{tpu_custom_call.1} parent=11 // pred_check
          %p235 = pneg %p161
        $region30: #{tpu_custom_call.1} parent=11 // pred_check_branch
          %237 = sbr.rel (%p235) target = $region32
        $region31: #{tpu_custom_call.1} parent=11 // pred_region
          _
        $region32: #{tpu_custom_call.1} parent=11 // pred_fallthru
          _
        // Predicated region
        $region33: #{tpu_custom_call.1} parent=11 // pred_check
          %p238 = pneg %p182
        $region34: #{tpu_custom_call.1} parent=11 // pred_check_branch
          %240 = sbr.rel (%p238) target = $region36
        $region35: #{tpu_custom_call.1} parent=11 // pred_region
          _
        $region36: #{tpu_custom_call.1} parent=11 // pred_fallthru
          _
      $region12: #{tpu_custom_call.1} parent=5 // pred_fallthru
        _
      %p241 = scmp.lt.s32.totalorder %s16, 4
      // Predicated region
      $region37: #{tpu_custom_call.1} parent=5 // pred_check
        %p242 = pneg %p241
      $region38: #{tpu_custom_call.1} parent=5 // pred_check_branch
        %244 = sbr.rel (%p242) target = $region40
      $region39: #{tpu_custom_call.1} parent=5 // pred_region
        // Predicated region
        $region41: #{tpu_custom_call.1} parent=39 // pred_check
          %p245 = pneg %p50
        $region42: #{tpu_custom_call.1} parent=39 // pred_check_branch
          %247 = sbr.rel (%p245) target = $region44
        $region43: #{tpu_custom_call.1} parent=39 // pred_region
          %p248 = scmp.lt.s32.totalorder %s23, 1
          %s249 = scalar_select %p248, %s23, 1
          %p250 = scmp.lt.s32.totalorder %s24, 1
          %s251 = scalar_select %p250, %s24, 1
          %s252 = smul.addr %s249, 2
          %s253 = sadd.s32 %s251, %s252
          %s254 = smul.addr %s253, 4
          %s255 = scalar_lea.vmem %s0, %s254
        $region44: #{tpu_custom_call.1} parent=39 // pred_fallthru
          _
      $region40: #{tpu_custom_call.1} parent=5 // pred_fallthru
        _
      %p256 = scmp.le.s32.totalorder 1, %s16
      %p257 = scmp.lt.s32.totalorder %s16, 5
      %p258 = pnand %p256, %p257
      %p259 = pneg %p258
      // Predicated region
      $region45: #{tpu_custom_call.1} parent=5 // pred_check
        _
      $region46: #{tpu_custom_call.1} parent=5 // pred_check_branch
        %261 = sbr.rel (%p258) target = $region48
      $region47: #{tpu_custom_call.1} parent=5 // pred_region
        %s262 = ssub.s32 %s16, 1
        %p263 = scmp.lt.s32.totalorder %s25, 1
        %s264 = scalar_select %p263, %s25, 1
        %p265 = scmp.lt.s32.totalorder %s26, 1
        %s266 = scalar_select %p265, %s26, 1
        %s267 = smul.addr %s264, 2
        %s268 = sadd.s32 %s266, %s267
        %s269 = smul.addr %s268, 4
        %s270 = scalar_lea.vmem %s0, %s269
        %p271 = pneg %p56
        %p272 = pneg %p53
        %p273 = pneg %p77
        %p274 = pneg %p74
        %p275 = pneg %p98
        %p276 = pneg %p95
        %p277 = pneg %p119
        %p278 = pneg %p116
        %p279 = pneg %p140
        %p280 = pneg %p137
        %p281 = pneg %p161
        %p282 = pneg %p158
        %p283 = pneg %p182
        %p284 = pneg %p179
        %p285 = pneg %p208
        %p286 = pneg %p205
        %s287 = sand.u32 %s195, 1
        %s288 = scalar_lea.sflag [#allocation4], %s287
        %s289 = sand.u32 %s195, 1
        %s290 = scalar_lea.vmem [#allocation3], %s289
        %p291 = scmp.lt.s32.totalorder %s25, 1
        %s292 = scalar_select %p291, %s25, 1
        %p293 = scmp.lt.s32.totalorder %s26, 1
        %s294 = scalar_select %p293, %s26, 1
        %s295 = smul.addr %s292, 2
        %s296 = sadd.s32 %s294, %s295
        %s297 = smul.addr %s296, 4
        %s298 = scalar_lea.vmem %s0, %s297
        %v299 = vld [vmem:[%s298] sm:$0x7]
        %v300 = vld [vmem:[%s1] sm:$0xff]
        %v301 = vld [vmem:[%s1 + $0x8] sm:$0xff]
        %v302 = vld [vmem:[%s1 + $0x10] sm:$0xff]
        %v303 = vld [vmem:[%s1 + $0x18] sm:$0xff]
        %v304 = vld [vmem:[%s2] sm:$0xff]
        %v305 = vld [vmem:[%s2 + $0x8] sm:$0xff]
        %v306 = vld [vmem:[%s2 + $0x10] sm:$0xff]
        %v307 = vld [vmem:[%s2 + $0x18] sm:$0xff]
        %309 = vset.pattern.permute.xlu0 0
        %310 = vperm.xlu0 %309, %v304
        %v311 = vpop.permute.xlu0 %310
        %314 = vset.pattern.permute.xlu0 0
        %315 = vperm.xlu0 %314, %v305
        %v316 = vpop.permute.xlu0 %315
        %319 = vset.pattern.permute.xlu0 0
        %320 = vperm.xlu0 %319, %v306
        %v321 = vpop.permute.xlu0 %320
        %324 = vset.pattern.permute.xlu0 0
        %325 = vperm.xlu0 %324, %v307
        %v326 = vpop.permute.xlu0 %325
        %vm328 = vcmask 23552
        %v330 = vsel %vm328, %v300, 0
        %v333 = vsel %vm328, %v301, 0
        %v336 = vsel %vm328, %v302, 0
        %v339 = vsel %vm328, %v303, 0
        %vm341 = vcmask 1042432
        %v343 = vsel %vm341, %v299, 0
        %345 = vmatprep.subr.mxu0 0.0
        %346 = vmatpush1.msra.mxu0 %v343
        %347 = vmatprep.subr.mxu0 0.0
        %348 = vmatpush1.msra.mxu0 0.0
        %349 = vmatprep.subr.mxu0 0.0
        %350 = vmatpush1.msra.mxu0 0.0
        %351 = vmatprep.subr.mxu0 0.0
        %352 = vmatpush1.msra.mxu0 0.0
        %353 = vmatprep.subr.mxu0 0.0
        %354 = vmatpush1.msra.mxu0 0.0
        %355 = vmatprep.subr.mxu0 0.0
        %356 = vmatpush1.msra.mxu0 0.0
        %357 = vmatprep.subr.mxu0 0.0
        %358 = vmatpush1.msra.mxu0 0.0
        %359 = vmatprep.subr.mxu0 0.0
        %360 = vmatpush1.msra.mxu0 0.0
        %361 = vmatprep.subr.mxu0 0.0
        %362 = vmatpush1.msra.mxu0 0.0
        %363 = vmatprep.subr.mxu0 0.0
        %364 = vmatpush1.msra.mxu0 0.0
        %365 = vmatprep.subr.mxu0 0.0
        %366 = vmatpush1.msra.mxu0 0.0
        %367 = vmatprep.subr.mxu0 0.0
        %368 = vmatpush1.msra.mxu0 0.0
        %369 = vmatprep.subr.mxu0 0.0
        %370 = vmatpush1.msra.mxu0 0.0
        %371 = vmatprep.subr.mxu0 0.0
        %372 = vmatpush1.msra.mxu0 0.0
        %373 = vmatprep.subr.mxu0 0.0
        %374 = vmatpush1.msra.mxu0 0.0
        %375 = vmatprep.subr.mxu0 0.0
        %376 = vmatpush1.msra.mxu0 0.0
        %377 = vmatprep.subr.mxu0 0.0
        %378 = vmatpush1.msra.mxu0 0.0
        %379 = vmatprep.subr.mxu0 0.0
        %380 = vmatpush1.msra.mxu0 0.0
        %381 = vmatprep.subr.mxu0 0.0
        %382 = vmatpush1.msra.mxu0 0.0
        %383 = vmatprep.subr.mxu0 0.0
        %384 = vmatpush1.msra.mxu0 0.0
        %385 = vmatprep.subr.mxu0 0.0
        %386 = vmatpush1.msra.mxu0 0.0
        %387 = vmatprep.subr.mxu0 0.0
        %388 = vmatpush1.msra.mxu0 0.0
        %389 = vmatprep.subr.mxu0 0.0
        %390 = vmatpush1.msra.mxu0 0.0
        %391 = vmatprep.subr.mxu0 0.0
        %392 = vmatpush1.msra.mxu0 0.0
        %393 = vmatprep.subr.mxu0 0.0
        %394 = vmatpush1.msra.mxu0 0.0
        %395 = vmatprep.subr.mxu0 0.0
        %396 = vmatpush1.msra.mxu0 0.0
        %397 = vmatprep.subr.mxu0 0.0
        %398 = vmatpush1.msra.mxu0 0.0
        %399 = vmatprep.subr.mxu0 0.0
        %400 = vmatpush1.msra.mxu0 0.0
        %401 = vmatprep.subr.mxu0 0.0
        %402 = vmatpush1.msra.mxu0 0.0
        %403 = vmatprep.subr.mxu0 0.0
        %404 = vmatpush1.msra.mxu0 0.0
        %405 = vmatprep.subr.mxu0 0.0
        %406 = vmatpush1.msra.mxu0 0.0
        %407 = vmatprep.subr.mxu0 0.0
        %408 = vmatpush1.msra.mxu0 0.0
        %409 = vmatprep.mubr.f32.mxu0 0.0
        %410 = vmatmul.mubr.f32.gmra.mrb[0].mxu0 %v330
        %v411 = vpop.f32.mrb[0].mxu0
        %v412 = vadd.f32 %v311, %v411
        %v413 = vpop.f32.mrb[0].mxu0
        %414 = vmatprep.mubr.f32.mxu0 0.0
        %415 = vmatmul.mubr.f32.gmra.mrb[0].mxu0 %v333
        %v416 = vpop.f32.mrb[0].mxu0
        %v417 = vadd.f32 %v316, %v416
        %v418 = vpop.f32.mrb[0].mxu0
        %419 = vmatprep.mubr.f32.mxu0 0.0
        %420 = vmatmul.mubr.f32.gmra.mrb[0].mxu0 %v336
        %v421 = vpop.f32.mrb[0].mxu0
        %v422 = vadd.f32 %v321, %v421
        %v423 = vpop.f32.mrb[0].mxu0
        %424 = vmatprep.mubr.f32.mxu0 0.0
        %425 = vmatmul.mubr.f32.gmra.mrb[0].mxu0 %v339
        %v426 = vpop.f32.mrb[0].mxu0
        %v427 = vadd.f32 %v326, %v426
        %v428 = vpop.f32.mrb[0].mxu0
        %429 = vdwg.mxu0
        %v430 = vmax.f32 %v412, 0.0
        %v431 = vmax.f32 %v417, 0.0
        %v432 = vmax.f32 %v422, 0.0
        %v433 = vmax.f32 %v427, 0.0
        %v434 = vld [vmem:[%s3] sm:$0xff]
        %v435 = vld [vmem:[%s3 + $0x8] sm:$0xff]
        %v436 = vld [vmem:[%s3 + $0x10] sm:$0xff]
        %v437 = vld [vmem:[%s3 + $0x18] sm:$0xff]
        %v438 = vld [vmem:[%s4] sm:$0xff]
        %v439 = vld [vmem:[%s4 + $0x8] sm:$0xff]
        %v440 = vld [vmem:[%s4 + $0x10] sm:$0xff]
        %v441 = vld [vmem:[%s4 + $0x18] sm:$0xff]
        %443 = vset.pattern.permute.xlu0 0
        %444 = vperm.xlu0 %443, %v438
        %v445 = vpop.permute.xlu0 %444
        %448 = vset.pattern.permute.xlu0 0
        %449 = vperm.xlu0 %448, %v439
        %v450 = vpop.permute.xlu0 %449
        %453 = vset.pattern.permute.xlu0 0
        %454 = vperm.xlu0 %453, %v440
        %v455 = vpop.permute.xlu0 %454
        %458 = vset.pattern.permute.xlu0 0
        %459 = vperm.xlu0 %458, %v441
        %v460 = vpop.permute.xlu0 %459
        %vm462 = vcmask 261120
        %v464 = vsel %vm462, %v434, 0
        %v467 = vsel %vm462, %v435, 0
        %v470 = vsel %vm462, %v436, 0
        %v473 = vsel %vm462, %v437, 0
        %475 = vmatprep.subr.mxu0 0.0
        %476 = vmatpush1.msra.mxu0 %v430
        %477 = vmatprep.subr.mxu0 0.0
        %478 = vmatpush1.msra.mxu0 %v431
        %479 = vmatprep.subr.mxu0 0.0
        %480 = vmatpush1.msra.mxu0 %v432
        %481 = vmatprep.subr.mxu0 0.0
        %482 = vmatpush1.msra.mxu0 %v433
        %483 = vmatprep.subr.mxu0 0.0
        %484 = vmatpush1.msra.mxu0 0.0
        %485 = vmatprep.subr.mxu0 0.0
        %486 = vmatpush1.msra.mxu0 0.0
        %487 = vmatprep.subr.mxu0 0.0
        %488 = vmatpush1.msra.mxu0 0.0
        %489 = vmatprep.subr.mxu0 0.0
        %490 = vmatpush1.msra.mxu0 0.0
        %491 = vmatprep.subr.mxu0 0.0
        %492 = vmatpush1.msra.mxu0 0.0
        %493 = vmatprep.subr.mxu0 0.0
        %494 = vmatpush1.msra.mxu0 0.0
        %495 = vmatprep.subr.mxu0 0.0
        %496 = vmatpush1.msra.mxu0 0.0
        %497 = vmatprep.subr.mxu0 0.0
        %498 = vmatpush1.msra.mxu0 0.0
        %499 = vmatprep.subr.mxu0 0.0
        %500 = vmatpush1.msra.mxu0 0.0
        %501 = vmatprep.subr.mxu0 0.0
        %502 = vmatpush1.msra.mxu0 0.0
        %503 = vmatprep.subr.mxu0 0.0
        %504 = vmatpush1.msra.mxu0 0.0
        %505 = vmatprep.subr.mxu0 0.0
        %506 = vmatpush1.msra.mxu0 0.0
        %507 = vmatprep.subr.mxu0 0.0
        %508 = vmatpush1.msra.mxu0 0.0
        %509 = vmatprep.subr.mxu0 0.0
        %510 = vmatpush1.msra.mxu0 0.0
        %511 = vmatprep.subr.mxu0 0.0
        %512 = vmatpush1.msra.mxu0 0.0
        %513 = vmatprep.subr.mxu0 0.0
        %514 = vmatpush1.msra.mxu0 0.0
        %515 = vmatprep.subr.mxu0 0.0
        %516 = vmatpush1.msra.mxu0 0.0
        %517 = vmatprep.subr.mxu0 0.0
        %518 = vmatpush1.msra.mxu0 0.0
        %519 = vmatprep.subr.mxu0 0.0
        %520 = vmatpush1.msra.mxu0 0.0
        %521 = vmatprep.subr.mxu0 0.0
        %522 = vmatpush1.msra.mxu0 0.0
        %523 = vmatprep.subr.mxu0 0.0
        %524 = vmatpush1.msra.mxu0 0.0
        %525 = vmatprep.subr.mxu0 0.0
        %526 = vmatpush1.msra.mxu0 0.0
        %527 = vmatprep.subr.mxu0 0.0
        %528 = vmatpush1.msra.mxu0 0.0
        %529 = vmatprep.subr.mxu0 0.0
        %530 = vmatpush1.msra.mxu0 0.0
        %531 = vmatprep.subr.mxu0 0.0
        %532 = vmatpush1.msra.mxu0 0.0
        %533 = vmatprep.subr.mxu0 0.0
        %534 = vmatpush1.msra.mxu0 0.0
        %535 = vmatprep.subr.mxu0 0.0
        %536 = vmatpush1.msra.mxu0 0.0
        %537 = vmatprep.subr.mxu0 0.0
        %538 = vmatpush1.msra.mxu0 0.0
        %539 = vmatprep.mubr.f32.mxu0 0.0
        %540 = vmatmul.mubr.f32.gmra.mrb[0].mxu0 %v464
        %v541 = vpop.f32.mrb[0].mxu0
        %v542 = vadd.f32 %v445, %v541
        %v543 = vpop.f32.mrb[0].mxu0
        %544 = vmatprep.mubr.f32.mxu0 0.0
        %545 = vmatmul.mubr.f32.gmra.mrb[0].mxu0 %v467
        %v546 = vpop.f32.mrb[0].mxu0
        %v547 = vadd.f32 %v450, %v546
        %v548 = vpop.f32.mrb[0].mxu0
        %549 = vmatprep.mubr.f32.mxu0 0.0
        %550 = vmatmul.mubr.f32.gmra.mrb[0].mxu0 %v470
        %v551 = vpop.f32.mrb[0].mxu0
        %v552 = vadd.f32 %v455, %v551
        %v553 = vpop.f32.mrb[0].mxu0
        %554 = vmatprep.mubr.f32.mxu0 0.0
        %555 = vmatmul.mubr.f32.gmra.mrb[0].mxu0 %v473
        %v556 = vpop.f32.mrb[0].mxu0
        %v557 = vadd.f32 %v460, %v556
        %v558 = vpop.f32.mrb[0].mxu0
        %559 = vdwg.mxu0
        %v560 = vmax.f32 %v542, 0.0
        %v561 = vmax.f32 %v547, 0.0
        %v562 = vmax.f32 %v552, 0.0
        %v563 = vmax.f32 %v557, 0.0
        %564 = vmax.xlane.f32.xlu0 %v560
        %v565 = vpop.xlane.xlu0 %564
        %566 = vmax.xlane.f32.xlu0 %v561
        %v567 = vpop.xlane.xlu0 %566
        %568 = vmax.xlane.f32.xlu0 %v562
        %v569 = vpop.xlane.xlu0 %568
        %570 = vmax.xlane.f32.xlu0 %v563
        %v571 = vpop.xlane.xlu0 %570
        %p572 = scmp.eq.s32.totalorder %s26, 0
        // Predicated region
        $region49: #{tpu_custom_call.1} parent=47 // pred_check
          %p573 = pneg %p572
        $region50: #{tpu_custom_call.1} parent=47 // pred_check_branch
          %575 = sbr.rel (%p573) target = $region52
        $region51: #{tpu_custom_call.1} parent=47 // pred_region
          %vm576 = vcmask 7168
          %577 = vst.msk [vmem:[#allocation2] sm:$0xff] %vm576, -inf
          %578 = vst.msk [vmem:[#allocation2 + $0x8] sm:$0xff] %vm576, -inf
          %579 = vst.msk [vmem:[#allocation2 + $0x10] sm:$0xff] %vm576, -inf
          %580 = vst.msk [vmem:[#allocation2 + $0x18] sm:$0xff] %vm576, -inf
        $region52: #{tpu_custom_call.1} parent=47 // pred_fallthru
          _
        %v581 = vld [vmem:[#allocation2] sm:$0xff]
        %v582 = vld [vmem:[#allocation2 + $0x8] sm:$0xff]
        %v583 = vld [vmem:[#allocation2 + $0x10] sm:$0xff]
        %v584 = vld [vmem:[#allocation2 + $0x18] sm:$0xff]
        %v585 = vmax.f32 %v581, %v565
        %v586 = vmax.f32 %v582, %v567
        %v587 = vmax.f32 %v583, %v569
        %v588 = vmax.f32 %v584, %v571
        %vm589 = vcmask 7168
        %590 = vst.msk [vmem:[#allocation2] sm:$0xff] %vm589, %v585
        %591 = vst.msk [vmem:[#allocation2 + $0x8] sm:$0xff] %vm589, %v586
        %592 = vst.msk [vmem:[#allocation2 + $0x10] sm:$0xff] %vm589, %v587
        %593 = vst.msk [vmem:[#allocation2 + $0x18] sm:$0xff] %vm589, %v588
        %p594 = scmp.eq.s32.totalorder %s26, 1
        // Predicated region
        $region53: #{tpu_custom_call.1} parent=47 // pred_check
          %p595 = pneg %p594
        $region54: #{tpu_custom_call.1} parent=47 // pred_check_branch
          %597 = sbr.rel (%p595) target = $region56
        $region55: #{tpu_custom_call.1} parent=47 // pred_region
          %v598 = vld [vmem:[#allocation2] sm:$0xff]
          %v599 = vld [vmem:[#allocation2 + $0x8] sm:$0xff]
          %v600 = vld [vmem:[#allocation2 + $0x10] sm:$0xff]
          %v601 = vld [vmem:[#allocation2 + $0x18] sm:$0xff]
          %v602 = vld [vmem:[%s5] sm:$0xff]
          %v603 = vld [vmem:[%s5 + $0x8] sm:$0xff]
          %v604 = vld [vmem:[%s5 + $0x10] sm:$0xff]
          %v605 = vld [vmem:[%s5 + $0x18] sm:$0xff]
          %v606 = vld [vmem:[%s6] sm:$0x1]
          %607 = vxpose.xlu0.b32.start [1/16] %v598, 128
          %608 = vxpose.xlu0.b32.cont [2/16] %v599, 128
          %609 = vxpose.xlu0.b32.cont [3/16] %v600, 128
          %610 = vxpose.xlu0.b32.cont [4/16] %v601, 128
          %611 = vxpose.xlu0.b32.cont [5/16] 0.0, 128
          %612 = vxpose.xlu0.b32.cont [6/16] 0.0, 128
          %613 = vxpose.xlu0.b32.cont [7/16] 0.0, 128
          %614 = vxpose.xlu0.b32.cont [8/16] 0.0, 128
          %615 = vxpose.xlu0.b32.cont [9/16] 0.0, 128
          %616 = vxpose.xlu0.b32.cont [10/16] 0.0, 128
          %617 = vxpose.xlu0.b32.cont [11/16] 0.0, 128
          %618 = vxpose.xlu0.b32.cont [12/16] 0.0, 128
          %619 = vxpose.xlu0.b32.cont [13/16] 0.0, 128
          %620 = vxpose.xlu0.b32.cont [14/16] 0.0, 128
          %621 = vxpose.xlu0.b32.cont [15/16] 0.0, 128
          %622 = vxpose.xlu0.b32.end [16/16] 0.0, 128
          %v623 = vpop.trf.xlu0
          %v624 = vpop.trf.xlu0
          %v625 = vpop.trf.xlu0
          %v626 = vpop.trf.xlu0
          %v627 = vpop.trf.xlu0
          %v628 = vpop.trf.xlu0
          %v629 = vpop.trf.xlu0
          %v630 = vpop.trf.xlu0
          %v631 = vpop.trf.xlu0
          %v632 = vpop.trf.xlu0
          %v633 = vpop.trf.xlu0
          %v634 = vpop.trf.xlu0
          %v635 = vpop.trf.xlu0
          %v636 = vpop.trf.xlu0
          %v637 = vpop.trf.xlu0
          %v638 = vpop.trf.xlu0
          %v640 = vsel %vm462, %v623, 0
          %642 = vmatprep.subr.mxu0 0.0
          %643 = vmatpush1.msra.mxu0 %v602
          %644 = vmatprep.subr.mxu0 0.0
          %645 = vmatpush1.msra.mxu0 %v603
          %646 = vmatprep.subr.mxu0 0.0
          %647 = vmatpush1.msra.mxu0 %v604
          %648 = vmatprep.subr.mxu0 0.0
          %649 = vmatpush1.msra.mxu0 %v605
          %650 = vmatprep.subr.mxu0 0.0
          %651 = vmatpush1.msra.mxu0 0.0
          %652 = vmatprep.subr.mxu0 0.0
          %653 = vmatpush1.msra.mxu0 0.0
          %654 = vmatprep.subr.mxu0 0.0
          %655 = vmatpush1.msra.mxu0 0.0
          %656 = vmatprep.subr.mxu0 0.0
          %657 = vmatpush1.msra.mxu0 0.0
          %658 = vmatprep.subr.mxu0 0.0
          %659 = vmatpush1.msra.mxu0 0.0
          %660 = vmatprep.subr.mxu0 0.0
          %661 = vmatpush1.msra.mxu0 0.0
          %662 = vmatprep.subr.mxu0 0.0
          %663 = vmatpush1.msra.mxu0 0.0
          %664 = vmatprep.subr.mxu0 0.0
          %665 = vmatpush1.msra.mxu0 0.0
          %666 = vmatprep.subr.mxu0 0.0
          %667 = vmatpush1.msra.mxu0 0.0
          %668 = vmatprep.subr.mxu0 0.0
          %669 = vmatpush1.msra.mxu0 0.0
          %670 = vmatprep.subr.mxu0 0.0
          %671 = vmatpush1.msra.mxu0 0.0
          %672 = vmatprep.subr.mxu0 0.0
          %673 = vmatpush1.msra.mxu0 0.0
          %674 = vmatprep.subr.mxu0 0.0
          %675 = vmatpush1.msra.mxu0 0.0
          %676 = vmatprep.subr.mxu0 0.0
          %677 = vmatpush1.msra.mxu0 0.0
          %678 = vmatprep.subr.mxu0 0.0
          %679 = vmatpush1.msra.mxu0 0.0
          %680 = vmatprep.subr.mxu0 0.0
          %681 = vmatpush1.msra.mxu0 0.0
          %682 = vmatprep.subr.mxu0 0.0
          %683 = vmatpush1.msra.mxu0 0.0
          %684 = vmatprep.subr.mxu0 0.0
          %685 = vmatpush1.msra.mxu0 0.0
          %686 = vmatprep.subr.mxu0 0.0
          %687 = vmatpush1.msra.mxu0 0.0
          %688 = vmatprep.subr.mxu0 0.0
          %689 = vmatpush1.msra.mxu0 0.0
          %690 = vmatprep.subr.mxu0 0.0
          %691 = vmatpush1.msra.mxu0 0.0
          %692 = vmatprep.subr.mxu0 0.0
          %693 = vmatpush1.msra.mxu0 0.0
          %694 = vmatprep.subr.mxu0 0.0
          %695 = vmatpush1.msra.mxu0 0.0
          %696 = vmatprep.subr.mxu0 0.0
          %697 = vmatpush1.msra.mxu0 0.0
          %698 = vmatprep.subr.mxu0 0.0
          %699 = vmatpush1.msra.mxu0 0.0
          %700 = vmatprep.subr.mxu0 0.0
          %701 = vmatpush1.msra.mxu0 0.0
          %702 = vmatprep.subr.mxu0 0.0
          %703 = vmatpush1.msra.mxu0 0.0
          %704 = vmatprep.subr.mxu0 0.0
          %705 = vmatpush1.msra.mxu0 0.0
          %706 = vmatprep.mubr.f32.mxu0 0.0
          %707 = vmatmul.mubr.f32.gmra.mrb[0].mxu0 %v640
          %v708 = vpop.f32.mrb[0].mxu0
          %v709 = vadd.f32 %v606, %v708
          %v710 = vpop.f32.mrb[0].mxu0
          %711 = vdwg.mxu0
          %v712 = vmax.f32 %v709, 0.0
          %vm713 = vcmask 122880
          %714 = vst.msk [vmem:[%s290] sm:$0x1] %vm713, %v712
        $region56: #{tpu_custom_call.1} parent=47 // pred_fallthru
          _
        %s715 = sand.u32 %s195, 1
        %s716 = scalar_lea.sflag [#allocation4], %s715
        %s717 = sand.u32 %s195, 1
        %s718 = scalar_lea.vmem [#allocation3], %s717
        // Predicated region
        $region57: #{tpu_custom_call.1} parent=47 // pred_check
          %p719 = pneg %p205
        $region58: #{tpu_custom_call.1} parent=47 // pred_check_branch
          %721 = sbr.rel (%p719) target = $region60
        $region59: #{tpu_custom_call.1} parent=47 // pred_region
          %s723 = ssub.s32 16, 16
          %724 = vsyncadd %s716, %s723
          %s725 = smul.addr %s25, 16
          %s726 = scalar_lea.hbm %s7, %s725
          %s728 = sshll.u32 %s718, 4
          %s729 = int_to_ptr.vmem [resolvable:$true] %s728
          %731 = dma.vmem_to_hbm [thread:$0]  %s729, 16, %s726, %s716
        $region60: #{tpu_custom_call.1} parent=47 // pred_fallthru
          _
      $region48: #{tpu_custom_call.1} parent=5 // pred_fallthru
        _
      %p732 = scmp.le.s32.totalorder 2, %s16
      // Predicated region
      $region61: #{tpu_custom_call.1} parent=5 // pred_check
        %p733 = pneg %p732
      $region62: #{tpu_custom_call.1} parent=5 // pred_check_branch
        %735 = sbr.rel (%p733) target = $region64
      $region63: #{tpu_custom_call.1} parent=5 // pred_region
        %s736 = ssub.s32 %s16, 2
        // Predicated region
        $region65: #{tpu_custom_call.1} parent=63 // pred_check
          %p737 = pneg %p211
        $region66: #{tpu_custom_call.1} parent=63 // pred_check_branch
          %739 = sbr.rel (%p737) target = $region68
        $region67: #{tpu_custom_call.1} parent=63 // pred_region
          %s740 = sand.u32 %s196, 1
          %s741 = scalar_lea.sflag [#allocation4], %s740
          %s742 = sand.u32 %s196, 1
          %s743 = scalar_lea.vmem [#allocation3], %s742
          %744 = dma.done %s741, 16
        $region68: #{tpu_custom_call.1} parent=63 // pred_fallthru
          _
      $region64: #{tpu_custom_call.1} parent=5 // pred_fallthru
        _
    $region6: #{tpu_custom_call.1} parent=1 // loop_footer
      %s20 = sadd.s32 1, %s16
    $region7: #{tpu_custom_call.1} parent=1 // loop_footer_branch
      %15 = sbr.rel target = $region3
    $region8: #{tpu_custom_call.1} parent=1 // loop_exit
      _
    %745 = vsyncpa [#allocation4], 1
    %s746 = scalar_lea.sflag [#allocation4], 1
    %747 = vsyncpa %s746, 1

</llo_original>
